<compile_context>
chip_gen: v6e
topology: v6e:2x2x1
jax: 0.10.0
libtpu: 0.0.40
codegen_flags: <defaults>
</compile_context>

<pallas_src>
import math

import jax
import jax.numpy as jnp
from jax.experimental import pallas as pl
from jax.experimental.pallas import tpu as pltpu

B = 8                      # batch
D_IN = 784                 # input features
D_IN_PAD = 896             # 784 padded up to 7 * 128 lanes
D_H = 32                   # hidden features
D_OUT = 10                 # output features
OUT_W = D_IN_PAD + 128     # single output slab: [gW0(896) | gW1(32) | gW2(32) | 0(64)]


def _reversed_siamese_kernel(x0_ref, act_ref, misc_ref, out_ref):
    f32 = jnp.float32

    # activation slab (8, 128) = [x1 | z1 | x2 | z2]  (static in-tile slices)
    x1 = act_ref[:, 0:32]
    z1 = act_ref[:, 32:64]
    x2 = act_ref[:, 64:96]
    z2 = act_ref[:, 96:128]

    # misc slab (32, 128) = [grad (padded) | W1 | W2 (rows padded) | 0]
    g = misc_ref[0:B, 0:D_H]          # (8, 32): grad with lanes 10:32 zero
    w1 = misc_ref[:, 32:64]           # (32, 32)
    w2 = misc_ref[:, 64:96]           # (32, 32): rows 10:32 zero

    # ---- layer 2: weight (10, 32), held padded to (32, 32) ----
    gw2 = jnp.einsum('bi,bj->ij', g, x2,
                     preferred_element_type=f32)          # (32, 32), rows >= 10 are zero
    g = jnp.dot(g, w2, preferred_element_type=f32)        # (8, 32)  (zero lanes x zero rows)
    g = jnp.where(z2 < 0, 0.0, g)                         # grad[z < 0] = 0

    # ---- layer 1: weight (32, 32) ----
    gw1 = jnp.einsum('bi,bj->ij', g, x1,
                     preferred_element_type=f32)          # (32, 32)
    g = jnp.dot(g, w1, preferred_element_type=f32)        # (8, 32)
    g = jnp.where(z1 < 0, 0.0, g)                         # grad[z < 0] = 0

    # ---- layer 0: weight (32, 784), columns padded to 896 ----
    gw0 = jnp.einsum('bi,bj->ij', g, x0_ref[...],
                     preferred_element_type=f32)          # (32, 896), cols >= 784 zero

    # single lane-dense output slab (32, 1024)
    out_ref[:, 0:D_IN_PAD] = gw0
    out_ref[:, D_IN_PAD:D_IN_PAD + D_H] = gw1
    out_ref[:, D_IN_PAD + D_H:D_IN_PAD + 2 * D_H] = gw2
    out_ref[:, D_IN_PAD + 2 * D_H:] = jnp.zeros(
        (D_H, OUT_W - D_IN_PAD - 2 * D_H), f32)

    # NOTE: the reference finally computes grad = grad @ weights[0] (and would
    # mask with inputs[0][1]); that value is discarded, so it is omitted here.


def reversed_siamese_net(grad, inputs, weights):
    """inputs: [(x0, None), (x1, z1), (x2, z2)]; weights: [W0, W1, W2].
    Returns [gW0, gW1, gW2] exactly like ReversedSiameseNet.forward."""
    (x0, _z0), (x1, z1), (x2, z2) = inputs
    _w0, w1, w2 = weights   # W0 only feeds the discarded final grad update

    f32 = jnp.float32

    # ---- wrapper-side layout plumbing: pack into lane-dense slabs ----
    x0_pad = jnp.pad(x0.astype(f32), ((0, 0), (0, D_IN_PAD - D_IN)))       # (8, 896)
    act_slab = jnp.concatenate([x1, z1, x2, z2], axis=1).astype(f32)       # (8, 128)
    grad_pad = jnp.zeros((D_H, D_H), f32).at[:B, :D_OUT].set(grad)         # (32, 32)
    w2_pad = jnp.pad(w2.astype(f32), ((0, D_H - D_OUT), (0, 0)))           # (32, 32)
    misc_slab = jnp.concatenate(
        [grad_pad, w1.astype(f32), w2_pad, jnp.zeros((D_H, D_H), f32)],
        axis=1)                                                            # (32, 128)

    out = pl.pallas_call(
        _reversed_siamese_kernel,
        in_specs=[
            pl.BlockSpec(memory_space=pltpu.MemorySpace.VMEM),   # x0 (padded)
            pl.BlockSpec(memory_space=pltpu.MemorySpace.VMEM),   # activation slab
            pl.BlockSpec(memory_space=pltpu.MemorySpace.VMEM),   # grad/weight slab
        ],
        out_specs=pl.BlockSpec(memory_space=pltpu.MemorySpace.VMEM),
        out_shape=jax.ShapeDtypeStruct((D_H, OUT_W), f32),
    )(x0_pad, act_slab, misc_slab)

    # slice the lane-dense slab back into the module's return shapes
    gw0 = out[:, :D_IN]                                        # (32, 784)
    gw1 = out[:, D_IN_PAD:D_IN_PAD + D_H]                      # (32, 32)
    gw2 = out[:D_OUT, D_IN_PAD + D_H:D_IN_PAD + 2 * D_H]       # (10, 32)
    return [gw0, gw1, gw2]


def _ref_forward(grad, inputs, weights):
    """Pure-JAX transcription of the PyTorch forward, for verification."""
    grad_weights = []
    g = grad
    for (x, z), w in zip(reversed(inputs), reversed(weights)):
        grad_weights.append(g.T @ x)
        g = g @ w
        if z is not None:
            g = jnp.where(z < 0, 0.0, g)
    return list(reversed(grad_weights))


def _kaiming_uniform(key, shape):
    # torch.nn.init.kaiming_uniform_(w, a=sqrt(5)) => U(-1/sqrt(fan_in), 1/sqrt(fan_in))
    fan_in = shape[1]
    bound = 1.0 / math.sqrt(fan_in)
    return jax.random.uniform(key, shape, jnp.float32, -bound, bound)


if __name__ == "__main__":
    keys = jax.random.split(jax.random.PRNGKey(0), 9)

    # parameters (deterministic, matching nn.Parameter shapes)
    w0 = _kaiming_uniform(keys[0], (D_H, D_IN))    # weights[0]: (32, 784)
    w1 = _kaiming_uniform(keys[1], (D_H, D_H))     # weights[1]: (32, 32)
    w2 = _kaiming_uniform(keys[2], (D_OUT, D_H))   # weights[2]: (10, 32)
    weights = [w0, w1, w2]

    # forward inputs
    grad = jax.random.normal(keys[3], (B, D_OUT), jnp.float32)
    x0 = jax.random.normal(keys[4], (B, D_IN), jnp.float32)
    x1 = jax.random.normal(keys[5], (B, D_H), jnp.float32)
    z1 = jax.random.normal(keys[6], (B, D_H), jnp.float32)
    x2 = jax.random.normal(keys[7], (B, D_H), jnp.float32)
    z2 = jax.random.normal(keys[8], (B, D_H), jnp.float32)
    inputs = [(x0, None), (x1, z1), (x2, z2)]   # inputs[0][1] is None (no ReLU at input)

    gw0, gw1, gw2 = reversed_siamese_net(grad, inputs, weights)
    jax.block_until_ready((gw0, gw1, gw2))

    r0, r1, r2 = _ref_forward(grad, inputs, weights)
    assert gw0.shape == (D_H, D_IN) and gw1.shape == (D_H, D_H) and gw2.shape == (D_OUT, D_H)
    assert jnp.allclose(gw0, r0, atol=1e-5, rtol=1e-5)
    assert jnp.allclose(gw1, r1, atol=1e-5, rtol=1e-5)
    assert jnp.allclose(gw2, r2, atol=1e-5, rtol=1e-5)

    print("KERNEL_OK")
</pallas_src>

<mosaic_0001>
module attributes {stable_mosaic.version = 11 : i64} {
  func.func @_reversed_siamese_kernel(%arg0: memref<8x896xf32, #tpu.memory_space<vmem>>, %arg1: memref<8x128xf32, #tpu.memory_space<vmem>>, %arg2: memref<32x128xf32, #tpu.memory_space<vmem>>, %arg3: memref<32x1024xf32, #tpu.memory_space<vmem>>) attributes {dimension_semantics = [], scalar_prefetch = 0 : i64, scratch_operands = 0 : i64, tpu.core_type = #tpu.core_type<tc>} {
    %c0 = arith.constant 0 : index
    %c0_0 = arith.constant 0 : index
    %0 = vector.load %arg1[%c0, %c0_0] : memref<8x128xf32, #tpu.memory_space<vmem>>, vector<8x32xf32>
    %c0_1 = arith.constant 0 : index
    %c32 = arith.constant 32 : index
    %1 = vector.load %arg1[%c0_1, %c32] : memref<8x128xf32, #tpu.memory_space<vmem>>, vector<8x32xf32>
    %c0_2 = arith.constant 0 : index
    %c64 = arith.constant 64 : index
    %2 = vector.load %arg1[%c0_2, %c64] : memref<8x128xf32, #tpu.memory_space<vmem>>, vector<8x32xf32>
    %c0_3 = arith.constant 0 : index
    %c96 = arith.constant 96 : index
    %3 = vector.load %arg1[%c0_3, %c96] : memref<8x128xf32, #tpu.memory_space<vmem>>, vector<8x32xf32>
    %c0_4 = arith.constant 0 : index
    %c0_5 = arith.constant 0 : index
    %4 = vector.load %arg2[%c0_4, %c0_5] : memref<32x128xf32, #tpu.memory_space<vmem>>, vector<8x32xf32>
    %c0_6 = arith.constant 0 : index
    %c32_7 = arith.constant 32 : index
    %5 = vector.load %arg2[%c0_6, %c32_7] : memref<32x128xf32, #tpu.memory_space<vmem>>, vector<32x32xf32>
    %c0_8 = arith.constant 0 : index
    %c64_9 = arith.constant 64 : index
    %6 = vector.load %arg2[%c0_8, %c64_9] : memref<32x128xf32, #tpu.memory_space<vmem>>, vector<32x32xf32>
    "tpu.trace_start"() <{level = 10 : i32, message = "bi,bj->ij"}> : () -> ()
    %cst = arith.constant dense<0.000000e+00> : vector<32x32xf32>
    %7 = tpu.matmul %4, %2, %cst {dimension_numbers = #tpu.dot_dimension_numbers<[0], [0], [1], [1], [0, 1, 1, 1], [], []>} : vector<8x32xf32>, vector<8x32xf32>, vector<32x32xf32> -> vector<32x32xf32>
    "tpu.trace_stop"() : () -> ()
    %cst_10 = arith.constant dense<0.000000e+00> : vector<8x32xf32>
    %8 = tpu.matmul %4, %6, %cst_10 {dimension_numbers = #tpu.dot_dimension_numbers<[1], [0], [0], [1], [0, 0, 1, 1], [], []>} : vector<8x32xf32>, vector<32x32xf32>, vector<8x32xf32> -> vector<8x32xf32>
    %cst_11 = arith.constant 0.000000e+00 : f32
    %9 = vector.broadcast %cst_11 : f32 to vector<8x32xf32>
    %10 = arith.cmpf olt, %3, %9 : vector<8x32xf32>
    %cst_12 = arith.constant 0.000000e+00 : f32
    %11 = vector.broadcast %cst_12 : f32 to vector<8x32xf32>
    %12 = arith.select %10, %11, %8 : vector<8x32xi1>, vector<8x32xf32>
    "tpu.trace_start"() <{level = 10 : i32, message = "bi,bj->ij"}> : () -> ()
    %cst_13 = arith.constant dense<0.000000e+00> : vector<32x32xf32>
    %13 = tpu.matmul %12, %0, %cst_13 {dimension_numbers = #tpu.dot_dimension_numbers<[0], [0], [1], [1], [0, 1, 1, 1], [], []>} : vector<8x32xf32>, vector<8x32xf32>, vector<32x32xf32> -> vector<32x32xf32>
    "tpu.trace_stop"() : () -> ()
    %cst_14 = arith.constant dense<0.000000e+00> : vector<8x32xf32>
    %14 = tpu.matmul %12, %5, %cst_14 {dimension_numbers = #tpu.dot_dimension_numbers<[1], [0], [0], [1], [0, 0, 1, 1], [], []>} : vector<8x32xf32>, vector<32x32xf32>, vector<8x32xf32> -> vector<8x32xf32>
    %cst_15 = arith.constant 0.000000e+00 : f32
    %15 = vector.broadcast %cst_15 : f32 to vector<8x32xf32>
    %16 = arith.cmpf olt, %1, %15 : vector<8x32xf32>
    %cst_16 = arith.constant 0.000000e+00 : f32
    %17 = vector.broadcast %cst_16 : f32 to vector<8x32xf32>
    %18 = arith.select %16, %17, %14 : vector<8x32xi1>, vector<8x32xf32>
    %c0_17 = arith.constant 0 : index
    %c0_18 = arith.constant 0 : index
    %19 = vector.load %arg0[%c0_17, %c0_18] : memref<8x896xf32, #tpu.memory_space<vmem>>, vector<8x896xf32>
    "tpu.trace_start"() <{level = 10 : i32, message = "bi,bj->ij"}> : () -> ()
    %cst_19 = arith.constant dense<0.000000e+00> : vector<32x896xf32>
    %20 = tpu.matmul %18, %19, %cst_19 {dimension_numbers = #tpu.dot_dimension_numbers<[0], [0], [1], [1], [0, 1, 1, 1], [], []>} : vector<8x32xf32>, vector<8x896xf32>, vector<32x896xf32> -> vector<32x896xf32>
    "tpu.trace_stop"() : () -> ()
    %c0_20 = arith.constant 0 : index
    %c0_21 = arith.constant 0 : index
    %21 = vector.load %arg3[%c0_20, %c0_21] : memref<32x1024xf32, #tpu.memory_space<vmem>>, vector<32x896xf32>
    tpu.vector_store %arg3[%c0_20, %c0_21], %20 {strides = array<i32>} : memref<32x1024xf32, #tpu.memory_space<vmem>>, vector<32x896xf32>,
    %c0_22 = arith.constant 0 : index
    %c896 = arith.constant 896 : index
    %22 = vector.load %arg3[%c0_22, %c896] : memref<32x1024xf32, #tpu.memory_space<vmem>>, vector<32x32xf32>
    tpu.vector_store %arg3[%c0_22, %c896], %13 {strides = array<i32>} : memref<32x1024xf32, #tpu.memory_space<vmem>>, vector<32x32xf32>,
    %c0_23 = arith.constant 0 : index
    %c928 = arith.constant 928 : index
    %23 = vector.load %arg3[%c0_23, %c928] : memref<32x1024xf32, #tpu.memory_space<vmem>>, vector<32x32xf32>
    tpu.vector_store %arg3[%c0_23, %c928], %7 {strides = array<i32>} : memref<32x1024xf32, #tpu.memory_space<vmem>>, vector<32x32xf32>,
    %cst_24 = arith.constant 0.000000e+00 : f32
    %24 = vector.broadcast %cst_24 : f32 to vector<32x64xf32>
    %c0_25 = arith.constant 0 : index
    %c960 = arith.constant 960 : index
    %25 = vector.load %arg3[%c0_25, %c960] : memref<32x1024xf32, #tpu.memory_space<vmem>>, vector<32x64xf32>
    tpu.vector_store %arg3[%c0_25, %c960], %24 {strides = array<i32>} : memref<32x1024xf32, #tpu.memory_space<vmem>>, vector<32x64xf32>,
    return
  }
}

</mosaic_0001>

<llo_original>
// kernel: tpu_custom_call.1
$region0: #{tpu_custom_call.1}
  #allocation0 [shape = 'u32[]', space=smem, size = 0x4, offset = 0x4, fixed_abs, tag = 'smem constant byte address 0x4 - core index']
  #allocation1 [shape = 'u32[144,128]{1,0:T(1,128)}', space=vmem, size = 0x12000, scoped, tag = 'internal scratch']
  %s0 = inlined_call_operand.hbm [shape: f32[8,896], index: 0, kind: input, shape index: {}]
  %s1 = inlined_call_operand.hbm [shape: f32[8,128], index: 1, kind: input, shape index: {}]
  %s2 = inlined_call_operand.hbm [shape: f32[32,128], index: 2, kind: input, shape index: {}]
  %s3 = inlined_call_operand.hbm [shape: f32[32,1024], index: 3, kind: output, shape index: {}]
  %s4 = sld [smem:[#allocation0]]
  $region34: #{tpu_custom_call.1} parent=0
    _
  %s6 = ssub.s32 1, %s4
  %s7 = scalar_select 0, %s6, %s4
  $region1: #{tpu_custom_call.1} parent=0
    #allocation2 [shape = 'u8[28672]{0}', space=vmem, size = 0x7000, scoped, tag = 'input window, operand 0, single buffered']
    #allocation3 [shape = 's32[1]{0}', space=sflag, size = 0x4, scoped, tag = 'scoped memory for tpu_custom_call.1']
    #allocation4 [shape = 's32[1]{0}', space=sflag, size = 0x4, scoped, tag = 'scoped memory for tpu_custom_call.1']
    #allocation5 [shape = 'u8[4096]{0}', space=vmem, size = 0x1000, scoped, tag = 'input window, operand 1, single buffered']
    #allocation6 [shape = 's32[1]{0}', space=sflag, size = 0x4, scoped, tag = 'scoped memory for tpu_custom_call.1']
    #allocation7 [shape = 'u8[16384]{0}', space=vmem, size = 0x4000, scoped, tag = 'input window, operand 2, single buffered']
    #allocation8 [shape = 'u8[131072]{0}', space=vmem, size = 0x20000, scoped, tag = 'output window, operand 0, single buffered']
    %8 = vsyncpa [#allocation3], 0
    %9 = vsyncpa [#allocation6], 0
    %10 = vsyncpa [#allocation4], 0
    // Predicated region
    $region2: #{tpu_custom_call.1} parent=1 // pred_check
      _
    $region3: #{tpu_custom_call.1} parent=1 // pred_check_branch
      %12 = sbr.rel (0) target = $region5
    $region4: #{tpu_custom_call.1} parent=1 // pred_region
      %s14 = ssub.s32 896, 896
      %15 = vsyncadd [#allocation3], %s14
      %s17 = sshll.u32 [#allocation2], 4
      %s18 = int_to_ptr.vmem [resolvable:$true] %s17
      %20 = dma.hbm_to_vmem [thread:$0]  %s0, 896, %s18, [#allocation3]
    $region5: #{tpu_custom_call.1} parent=1 // pred_fallthru
      _
    // Predicated region
    $region6: #{tpu_custom_call.1} parent=1 // pred_check
      _
    $region7: #{tpu_custom_call.1} parent=1 // pred_check_branch
      %22 = sbr.rel (0) target = $region9
    $region8: #{tpu_custom_call.1} parent=1 // pred_region
      %s24 = ssub.s32 128, 128
      %25 = vsyncadd [#allocation6], %s24
      %s27 = sshll.u32 [#allocation5], 4
      %s28 = int_to_ptr.vmem [resolvable:$true] %s27
      %30 = dma.hbm_to_vmem [thread:$0]  %s1, 128, %s28, [#allocation6]
    $region9: #{tpu_custom_call.1} parent=1 // pred_fallthru
      _
    // Predicated region
    $region10: #{tpu_custom_call.1} parent=1 // pred_check
      _
    $region11: #{tpu_custom_call.1} parent=1 // pred_check_branch
      %32 = sbr.rel (0) target = $region13
    $region12: #{tpu_custom_call.1} parent=1 // pred_region
      %s34 = ssub.s32 512, 512
      %35 = vsyncadd [#allocation6], %s34
      %s36 = sshll.u32 [#allocation7], 4
      %s37 = int_to_ptr.vmem [resolvable:$true] %s36
      %42 = dma.hbm_to_vmem [thread:$0]  %s2, 512, %s37, [#allocation6], 128, 128, 8
    $region13: #{tpu_custom_call.1} parent=1 // pred_fallthru
      _
    // Predicated region
    $region14: #{tpu_custom_call.1} parent=1 // pred_check
      _
    $region15: #{tpu_custom_call.1} parent=1 // pred_check_branch
      %44 = sbr.rel (0) target = $region17
    $region16: #{tpu_custom_call.1} parent=1 // pred_region
      %45 = dma.done [#allocation3], 896
    $region17: #{tpu_custom_call.1} parent=1 // pred_fallthru
      _
    // Predicated region
    $region18: #{tpu_custom_call.1} parent=1 // pred_check
      _
    $region19: #{tpu_custom_call.1} parent=1 // pred_check_branch
      %47 = sbr.rel (0) target = $region21
    $region20: #{tpu_custom_call.1} parent=1 // pred_region
      %48 = dma.done [#allocation6], 128
    $region21: #{tpu_custom_call.1} parent=1 // pred_fallthru
      _
    // Predicated region
    $region22: #{tpu_custom_call.1} parent=1 // pred_check
      _
    $region23: #{tpu_custom_call.1} parent=1 // pred_check_branch
      %50 = sbr.rel (0) target = $region25
    $region24: #{tpu_custom_call.1} parent=1 // pred_region
      %51 = dma.done [#allocation6], 512
    $region25: #{tpu_custom_call.1} parent=1 // pred_fallthru
      _
    %v52 = vld [vmem:[#allocation5] sm:$0xff]
    %v53 = vld [vmem:[#allocation7] sm:$0xff]
    %v54 = vld [vmem:[#allocation7] sm:$0xff]
    %v55 = vld [vmem:[#allocation7 + $0x8] sm:$0xff]
    %v56 = vld [vmem:[#allocation7 + $0x10] sm:$0xff]
    %v57 = vld [vmem:[#allocation7 + $0x18] sm:$0xff]
    %58 = vxpose.xlu0.b32.start [1/16] %v53, 128
    %59 = vxpose.xlu0.b32.cont [2/16] 0.0, 128
    %60 = vxpose.xlu0.b32.cont [3/16] 0.0, 128
    %61 = vxpose.xlu0.b32.cont [4/16] 0.0, 128
    %62 = vxpose.xlu0.b32.cont [5/16] 0.0, 128
    %63 = vxpose.xlu0.b32.cont [6/16] 0.0, 128
    %64 = vxpose.xlu0.b32.cont [7/16] 0.0, 128
    %65 = vxpose.xlu0.b32.cont [8/16] 0.0, 128
    %66 = vxpose.xlu0.b32.cont [9/16] 0.0, 128
    %67 = vxpose.xlu0.b32.cont [10/16] 0.0, 128
    %68 = vxpose.xlu0.b32.cont [11/16] 0.0, 128
    %69 = vxpose.xlu0.b32.cont [12/16] 0.0, 128
    %70 = vxpose.xlu0.b32.cont [13/16] 0.0, 128
    %71 = vxpose.xlu0.b32.cont [14/16] 0.0, 128
    %72 = vxpose.xlu0.b32.cont [15/16] 0.0, 128
    %73 = vxpose.xlu0.b32.end [16/16] 0.0, 128
    %v74 = vpop.trf.xlu0
    %v75 = vpop.trf.xlu0
    %v76 = vpop.trf.xlu0
    %v77 = vpop.trf.xlu0
    %v78 = vpop.trf.xlu0
    %v79 = vpop.trf.xlu0
    %v80 = vpop.trf.xlu0
    %v81 = vpop.trf.xlu0
    %v82 = vpop.trf.xlu0
    %v83 = vpop.trf.xlu0
    %v84 = vpop.trf.xlu0
    %v85 = vpop.trf.xlu0
    %v86 = vpop.trf.xlu0
    %v87 = vpop.trf.xlu0
    %v88 = vpop.trf.xlu0
    %v89 = vpop.trf.xlu0
    %91 = vrot.lane.b32.xlu0 %v52, 64
    %v92 = vpop.permute.xlu0 %91
    %vm94 = vcmask 64512
    %v96 = vsel %vm94, %v74, 0
    %v99 = vsel %vm94, %v75, 0
    %v102 = vsel %vm94, %v76, 0
    %v105 = vsel %vm94, %v77, 0
    %107 = vmatprep.subr.mxu0 0.0
    %108 = vmatpush1.msra.mxu0 0.0
    %109 = vmatprep.subr.mxu0 0.0
    %110 = vmatpush1.msra.mxu0 0.0
    %111 = vmatprep.subr.mxu0 0.0
    %112 = vmatpush1.msra.mxu0 0.0
    %113 = vmatprep.subr.mxu0 0.0
    %114 = vmatpush1.msra.mxu0 0.0
    %115 = vmatprep.subr.mxu0 0.0
    %116 = vmatpush1.msra.mxu0 0.0
    %117 = vmatprep.subr.mxu0 0.0
    %118 = vmatpush1.msra.mxu0 0.0
    %119 = vmatprep.subr.mxu0 0.0
    %120 = vmatpush1.msra.mxu0 0.0
    %121 = vmatprep.subr.mxu0 0.0
    %122 = vmatpush1.msra.mxu0 0.0
    %123 = vmatprep.subr.mxu0 0.0
    %124 = vmatpush1.msra.mxu0 0.0
    %125 = vmatprep.subr.mxu0 0.0
    %126 = vmatpush1.msra.mxu0 0.0
    %127 = vmatprep.subr.mxu0 0.0
    %128 = vmatpush1.msra.mxu0 0.0
    %129 = vmatprep.subr.mxu0 0.0
    %130 = vmatpush1.msra.mxu0 0.0
    %131 = vmatprep.subr.mxu0 0.0
    %132 = vmatpush1.msra.mxu0 0.0
    %133 = vmatprep.subr.mxu0 0.0
    %134 = vmatpush1.msra.mxu0 0.0
    %135 = vmatprep.subr.mxu0 0.0
    %136 = vmatpush1.msra.mxu0 0.0
    %137 = vmatprep.subr.mxu0 0.0
    %138 = vmatpush1.msra.mxu0 %v92
    %139 = vmatprep.subr.mxu0 0.0
    %140 = vmatpush2.msra.mxu0 0.0
    %141 = vmatprep.subr.mxu0 0.0
    %142 = vmatpush2.msra.mxu0 0.0
    %143 = vmatprep.subr.mxu0 0.0
    %144 = vmatpush2.msra.mxu0 0.0
    %145 = vmatprep.subr.mxu0 0.0
    %146 = vmatpush2.msra.mxu0 0.0
    %147 = vmatprep.subr.mxu0 0.0
    %148 = vmatpush2.msra.mxu0 0.0
    %149 = vmatprep.subr.mxu0 0.0
    %150 = vmatpush2.msra.mxu0 0.0
    %151 = vmatprep.subr.mxu0 0.0
    %152 = vmatpush2.msra.mxu0 0.0
    %153 = vmatprep.subr.mxu0 0.0
    %154 = vmatpush2.msra.mxu0 0.0
    %155 = vmatprep.subr.mxu0 0.0
    %156 = vmatpush2.msra.mxu0 0.0
    %157 = vmatprep.subr.mxu0 0.0
    %158 = vmatpush2.msra.mxu0 0.0
    %159 = vmatprep.subr.mxu0 0.0
    %160 = vmatpush2.msra.mxu0 0.0
    %161 = vmatprep.subr.mxu0 0.0
    %162 = vmatpush2.msra.mxu0 0.0
    %163 = vmatprep.subr.mxu0 0.0
    %164 = vmatpush2.msra.mxu0 0.0
    %165 = vmatprep.subr.mxu0 0.0
    %166 = vmatpush2.msra.mxu0 0.0
    %167 = vmatprep.subr.mxu0 0.0
    %168 = vmatpush2.msra.mxu0 0.0
    %169 = vmatprep.subr.mxu0 0.0
    %170 = vmatpush2.msra.mxu0 0.0
    %171 = vmatprep.mubr.f32.mxu0 0.0
    %172 = vmatmul.mubr.f32.gmra.mxu0 %v96
    %v173 = vpop.f32.mrf.mxu0
    %v174 = vadd.f32 0.0, %v173
    %v175 = vpop.f32.mrf.mxu0
    %176 = vmatprep.mubr.f32.mxu0 0.0
    %177 = vmatmul.mubr.f32.gmra.mxu0 %v99
    %v178 = vpop.f32.mrf.mxu0
    %v179 = vadd.f32 0.0, %v178
    %v180 = vpop.f32.mrf.mxu0
    %181 = vmatprep.mubr.f32.mxu0 0.0
    %182 = vmatmul.mubr.f32.gmra.mxu0 %v102
    %v183 = vpop.f32.mrf.mxu0
    %v184 = vadd.f32 0.0, %v183
    %v185 = vpop.f32.mrf.mxu0
    %186 = vmatprep.mubr.f32.mxu0 0.0
    %187 = vmatmul.mubr.f32.gmra.mxu0 %v105
    %v188 = vpop.f32.mrf.mxu0
    %v189 = vadd.f32 0.0, %v188
    %v190 = vpop.f32.mrf.mxu0
    %191 = vdwg.mxu0
    %196 = vrot.lane.b32.xlu0 %v54, 64
    %v197 = vpop.permute.xlu0 %196
    %198 = vrot.lane.b32.xlu0 %v55, 64
    %v199 = vpop.permute.xlu0 %198
    %200 = vrot.lane.b32.xlu0 %v56, 64
    %v201 = vpop.permute.xlu0 %200
    %202 = vrot.lane.b32.xlu0 %v57, 64
    %v203 = vpop.permute.xlu0 %202
    %vm208 = vcmask 261120
    %v210 = vsel %vm208, %v53, 0
    %212 = vmatprep.subr.mxu0 0.0
    %213 = vmatpush1.msra.mxu0 0.0
    %214 = vmatprep.subr.mxu0 0.0
    %215 = vmatpush1.msra.mxu0 0.0
    %216 = vmatprep.subr.mxu0 0.0
    %217 = vmatpush1.msra.mxu0 0.0
    %218 = vmatprep.subr.mxu0 0.0
    %219 = vmatpush1.msra.mxu0 0.0
    %220 = vmatprep.subr.mxu0 0.0
    %221 = vmatpush1.msra.mxu0 0.0
    %222 = vmatprep.subr.mxu0 0.0
    %223 = vmatpush1.msra.mxu0 0.0
    %224 = vmatprep.subr.mxu0 0.0
    %225 = vmatpush1.msra.mxu0 0.0
    %226 = vmatprep.subr.mxu0 0.0
    %227 = vmatpush1.msra.mxu0 0.0
    %228 = vmatprep.subr.mxu0 0.0
    %229 = vmatpush1.msra.mxu0 0.0
    %230 = vmatprep.subr.mxu0 0.0
    %231 = vmatpush1.msra.mxu0 0.0
    %232 = vmatprep.subr.mxu0 0.0
    %233 = vmatpush1.msra.mxu0 0.0
    %234 = vmatprep.subr.mxu0 0.0
    %235 = vmatpush1.msra.mxu0 0.0
    %236 = vmatprep.subr.mxu0 0.0
    %237 = vmatpush1.msra.mxu0 %v203
    %238 = vmatprep.subr.mxu0 0.0
    %239 = vmatpush1.msra.mxu0 %v201
    %240 = vmatprep.subr.mxu0 0.0
    %241 = vmatpush1.msra.mxu0 %v199
    %242 = vmatprep.subr.mxu0 0.0
    %243 = vmatpush1.msra.mxu0 %v197
    %244 = vmatprep.subr.mxu0 0.0
    %245 = vmatpush2.msra.mxu0 0.0
    %246 = vmatprep.subr.mxu0 0.0
    %247 = vmatpush2.msra.mxu0 0.0
    %248 = vmatprep.subr.mxu0 0.0
    %249 = vmatpush2.msra.mxu0 0.0
    %250 = vmatprep.subr.mxu0 0.0
    %251 = vmatpush2.msra.mxu0 0.0
    %252 = vmatprep.subr.mxu0 0.0
    %253 = vmatpush2.msra.mxu0 0.0
    %254 = vmatprep.subr.mxu0 0.0
    %255 = vmatpush2.msra.mxu0 0.0
    %256 = vmatprep.subr.mxu0 0.0
    %257 = vmatpush2.msra.mxu0 0.0
    %258 = vmatprep.subr.mxu0 0.0
    %259 = vmatpush2.msra.mxu0 0.0
    %260 = vmatprep.subr.mxu0 0.0
    %261 = vmatpush2.msra.mxu0 0.0
    %262 = vmatprep.subr.mxu0 0.0
    %263 = vmatpush2.msra.mxu0 0.0
    %264 = vmatprep.subr.mxu0 0.0
    %265 = vmatpush2.msra.mxu0 0.0
    %266 = vmatprep.subr.mxu0 0.0
    %267 = vmatpush2.msra.mxu0 0.0
    %268 = vmatprep.subr.mxu0 0.0
    %269 = vmatpush2.msra.mxu0 0.0
    %270 = vmatprep.subr.mxu0 0.0
    %271 = vmatpush2.msra.mxu0 0.0
    %272 = vmatprep.subr.mxu0 0.0
    %273 = vmatpush2.msra.mxu0 0.0
    %274 = vmatprep.subr.mxu0 0.0
    %275 = vmatpush2.msra.mxu0 0.0
    %276 = vmatprep.mubr.f32.mxu0 0.0
    %277 = vmatmul.mubr.f32.gmra.mxu0 %v210
    %v278 = vpop.f32.mrf.mxu0
    %v279 = vadd.f32 0.0, %v278
    %v280 = vpop.f32.mrf.mxu0
    %281 = vdwg.mxu0
    %vm282 = vcmp.lt.f32.partialorder %v52, 0.0
    %284 = vrot.lane.b32.xlu0 %v279, 96
    %v285 = vpop.permute.xlu0 %284
    %v287 = vsel %vm282, 0.0, %v285
    %289 = vrot.lane.b32.xlu0 %v287, 32
    %v290 = vpop.permute.xlu0 %289
    %292 = vxpose.xlu0.b32.start [1/16] %v290, 128
    %293 = vxpose.xlu0.b32.cont [2/16] 0.0, 128
    %294 = vxpose.xlu0.b32.cont [3/16] 0.0, 128
    %295 = vxpose.xlu0.b32.cont [4/16] 0.0, 128
    %296 = vxpose.xlu0.b32.cont [5/16] 0.0, 128
    %297 = vxpose.xlu0.b32.cont [6/16] 0.0, 128
    %298 = vxpose.xlu0.b32.cont [7/16] 0.0, 128
    %299 = vxpose.xlu0.b32.cont [8/16] 0.0, 128
    %300 = vxpose.xlu0.b32.cont [9/16] 0.0, 128
    %301 = vxpose.xlu0.b32.cont [10/16] 0.0, 128
    %302 = vxpose.xlu0.b32.cont [11/16] 0.0, 128
    %303 = vxpose.xlu0.b32.cont [12/16] 0.0, 128
    %304 = vxpose.xlu0.b32.cont [13/16] 0.0, 128
    %305 = vxpose.xlu0.b32.cont [14/16] 0.0, 128
    %306 = vxpose.xlu0.b32.cont [15/16] 0.0, 128
    %307 = vxpose.xlu0.b32.end [16/16] 0.0, 128
    %v308 = vpop.trf.xlu0
    %v309 = vpop.trf.xlu0
    %v310 = vpop.trf.xlu0
    %v311 = vpop.trf.xlu0
    %v312 = vpop.trf.xlu0
    %v313 = vpop.trf.xlu0
    %v314 = vpop.trf.xlu0
    %v315 = vpop.trf.xlu0
    %v316 = vpop.trf.xlu0
    %v317 = vpop.trf.xlu0
    %v318 = vpop.trf.xlu0
    %v319 = vpop.trf.xlu0
    %v320 = vpop.trf.xlu0
    %v321 = vpop.trf.xlu0
    %v322 = vpop.trf.xlu0
    %v323 = vpop.trf.xlu0
    %v325 = vsel %vm94, %v308, 0
    %v328 = vsel %vm94, %v309, 0
    %v331 = vsel %vm94, %v310, 0
    %v334 = vsel %vm94, %v311, 0
    %336 = vmatprep.subr.mxu0 0.0
    %337 = vmatpush1.msra.mxu0 0.0
    %338 = vmatprep.subr.mxu0 0.0
    %339 = vmatpush1.msra.mxu0 0.0
    %340 = vmatprep.subr.mxu0 0.0
    %341 = vmatpush1.msra.mxu0 0.0
    %342 = vmatprep.subr.mxu0 0.0
    %343 = vmatpush1.msra.mxu0 0.0
    %344 = vmatprep.subr.mxu0 0.0
    %345 = vmatpush1.msra.mxu0 0.0
    %346 = vmatprep.subr.mxu0 0.0
    %347 = vmatpush1.msra.mxu0 0.0
    %348 = vmatprep.subr.mxu0 0.0
    %349 = vmatpush1.msra.mxu0 0.0
    %350 = vmatprep.subr.mxu0 0.0
    %351 = vmatpush1.msra.mxu0 0.0
    %352 = vmatprep.subr.mxu0 0.0
    %353 = vmatpush1.msra.mxu0 0.0
    %354 = vmatprep.subr.mxu0 0.0
    %355 = vmatpush1.msra.mxu0 0.0
    %356 = vmatprep.subr.mxu0 0.0
    %357 = vmatpush1.msra.mxu0 0.0
    %358 = vmatprep.subr.mxu0 0.0
    %359 = vmatpush1.msra.mxu0 0.0
    %360 = vmatprep.subr.mxu0 0.0
    %361 = vmatpush1.msra.mxu0 0.0
    %362 = vmatprep.subr.mxu0 0.0
    %363 = vmatpush1.msra.mxu0 0.0
    %364 = vmatprep.subr.mxu0 0.0
    %365 = vmatpush1.msra.mxu0 0.0
    %366 = vmatprep.subr.mxu0 0.0
    %367 = vmatpush1.msra.mxu0 %v52
    %368 = vmatprep.subr.mxu0 0.0
    %369 = vmatpush2.msra.mxu0 0.0
    %370 = vmatprep.subr.mxu0 0.0
    %371 = vmatpush2.msra.mxu0 0.0
    %372 = vmatprep.subr.mxu0 0.0
    %373 = vmatpush2.msra.mxu0 0.0
    %374 = vmatprep.subr.mxu0 0.0
    %375 = vmatpush2.msra.mxu0 0.0
    %376 = vmatprep.subr.mxu0 0.0
    %377 = vmatpush2.msra.mxu0 0.0
    %378 = vmatprep.subr.mxu0 0.0
    %379 = vmatpush2.msra.mxu0 0.0
    %380 = vmatprep.subr.mxu0 0.0
    %381 = vmatpush2.msra.mxu0 0.0
    %382 = vmatprep.subr.mxu0 0.0
    %383 = vmatpush2.msra.mxu0 0.0
    %384 = vmatprep.subr.mxu0 0.0
    %385 = vmatpush2.msra.mxu0 0.0
    %386 = vmatprep.subr.mxu0 0.0
    %387 = vmatpush2.msra.mxu0 0.0
    %388 = vmatprep.subr.mxu0 0.0
    %389 = vmatpush2.msra.mxu0 0.0
    %390 = vmatprep.subr.mxu0 0.0
    %391 = vmatpush2.msra.mxu0 0.0
    %392 = vmatprep.subr.mxu0 0.0
    %393 = vmatpush2.msra.mxu0 0.0
    %394 = vmatprep.subr.mxu0 0.0
    %395 = vmatpush2.msra.mxu0 0.0
    %396 = vmatprep.subr.mxu0 0.0
    %397 = vmatpush2.msra.mxu0 0.0
    %398 = vmatprep.subr.mxu0 0.0
    %399 = vmatpush2.msra.mxu0 0.0
    %400 = vmatprep.mubr.f32.mxu0 0.0
    %401 = vmatmul.mubr.f32.gmra.mxu0 %v325
    %v402 = vpop.f32.mrf.mxu0
    %v403 = vadd.f32 0.0, %v402
    %v404 = vpop.f32.mrf.mxu0
    %405 = vmatprep.mubr.f32.mxu0 0.0
    %406 = vmatmul.mubr.f32.gmra.mxu0 %v328
    %v407 = vpop.f32.mrf.mxu0
    %v408 = vadd.f32 0.0, %v407
    %v409 = vpop.f32.mrf.mxu0
    %410 = vmatprep.mubr.f32.mxu0 0.0
    %411 = vmatmul.mubr.f32.gmra.mxu0 %v331
    %v412 = vpop.f32.mrf.mxu0
    %v413 = vadd.f32 0.0, %v412
    %v414 = vpop.f32.mrf.mxu0
    %415 = vmatprep.mubr.f32.mxu0 0.0
    %416 = vmatmul.mubr.f32.gmra.mxu0 %v334
    %v417 = vpop.f32.mrf.mxu0
    %v418 = vadd.f32 0.0, %v417
    %v419 = vpop.f32.mrf.mxu0
    %420 = vdwg.mxu0
    %421 = vrot.lane.b32.xlu0 %v54, 96
    %v422 = vpop.permute.xlu0 %421
    %423 = vrot.lane.b32.xlu0 %v55, 96
    %v424 = vpop.permute.xlu0 %423
    %425 = vrot.lane.b32.xlu0 %v56, 96
    %v426 = vpop.permute.xlu0 %425
    %427 = vrot.lane.b32.xlu0 %v57, 96
    %v428 = vpop.permute.xlu0 %427
    %v433 = vsel %vm208, %v290, 0
    %435 = vmatprep.subr.mxu0 0.0
    %436 = vmatpush1.msra.mxu0 0.0
    %437 = vmatprep.subr.mxu0 0.0
    %438 = vmatpush1.msra.mxu0 0.0
    %439 = vmatprep.subr.mxu0 0.0
    %440 = vmatpush1.msra.mxu0 0.0
    %441 = vmatprep.subr.mxu0 0.0
    %442 = vmatpush1.msra.mxu0 0.0
    %443 = vmatprep.subr.mxu0 0.0
    %444 = vmatpush1.msra.mxu0 0.0
    %445 = vmatprep.subr.mxu0 0.0
    %446 = vmatpush1.msra.mxu0 0.0
    %447 = vmatprep.subr.mxu0 0.0
    %448 = vmatpush1.msra.mxu0 0.0
    %449 = vmatprep.subr.mxu0 0.0
    %450 = vmatpush1.msra.mxu0 0.0
    %451 = vmatprep.subr.mxu0 0.0
    %452 = vmatpush1.msra.mxu0 0.0
    %453 = vmatprep.subr.mxu0 0.0
    %454 = vmatpush1.msra.mxu0 0.0
    %455 = vmatprep.subr.mxu0 0.0
    %456 = vmatpush1.msra.mxu0 0.0
    %457 = vmatprep.subr.mxu0 0.0
    %458 = vmatpush1.msra.mxu0 0.0
    %459 = vmatprep.subr.mxu0 0.0
    %460 = vmatpush1.msra.mxu0 %v428
    %461 = vmatprep.subr.mxu0 0.0
    %462 = vmatpush1.msra.mxu0 %v426
    %463 = vmatprep.subr.mxu0 0.0
    %464 = vmatpush1.msra.mxu0 %v424
    %465 = vmatprep.subr.mxu0 0.0
    %466 = vmatpush1.msra.mxu0 %v422
    %467 = vmatprep.subr.mxu0 0.0
    %468 = vmatpush2.msra.mxu0 0.0
    %469 = vmatprep.subr.mxu0 0.0
    %470 = vmatpush2.msra.mxu0 0.0
    %471 = vmatprep.subr.mxu0 0.0
    %472 = vmatpush2.msra.mxu0 0.0
    %473 = vmatprep.subr.mxu0 0.0
    %474 = vmatpush2.msra.mxu0 0.0
    %475 = vmatprep.subr.mxu0 0.0
    %476 = vmatpush2.msra.mxu0 0.0
    %477 = vmatprep.subr.mxu0 0.0
    %478 = vmatpush2.msra.mxu0 0.0
    %479 = vmatprep.subr.mxu0 0.0
    %480 = vmatpush2.msra.mxu0 0.0
    %481 = vmatprep.subr.mxu0 0.0
    %482 = vmatpush2.msra.mxu0 0.0
    %483 = vmatprep.subr.mxu0 0.0
    %484 = vmatpush2.msra.mxu0 0.0
    %485 = vmatprep.subr.mxu0 0.0
    %486 = vmatpush2.msra.mxu0 0.0
    %487 = vmatprep.subr.mxu0 0.0
    %488 = vmatpush2.msra.mxu0 0.0
    %489 = vmatprep.subr.mxu0 0.0
    %490 = vmatpush2.msra.mxu0 0.0
    %491 = vmatprep.subr.mxu0 0.0
    %492 = vmatpush2.msra.mxu0 0.0
    %493 = vmatprep.subr.mxu0 0.0
    %494 = vmatpush2.msra.mxu0 0.0
    %495 = vmatprep.subr.mxu0 0.0
    %496 = vmatpush2.msra.mxu0 0.0
    %497 = vmatprep.subr.mxu0 0.0
    %498 = vmatpush2.msra.mxu0 0.0
    %499 = vmatprep.mubr.f32.mxu0 0.0
    %500 = vmatmul.mubr.f32.gmra.mxu0 %v433
    %v501 = vpop.f32.mrf.mxu0
    %v502 = vadd.f32 0.0, %v501
    %v503 = vpop.f32.mrf.mxu0
    %504 = vdwg.mxu0
    %506 = vrot.lane.b32.xlu0 %v502, 32
    %v507 = vpop.permute.xlu0 %506
    %v509 = vsel %vm282, 0.0, %v507
    %v510 = vld [vmem:[#allocation2] sm:$0xff]
    %v511 = vld [vmem:[#allocation2 + $0x8] sm:$0xff]
    %v512 = vld [vmem:[#allocation2 + $0x10] sm:$0xff]
    %v513 = vld [vmem:[#allocation2 + $0x18] sm:$0xff]
    %v514 = vld [vmem:[#allocation2 + $0x20] sm:$0xff]
    %v515 = vld [vmem:[#allocation2 + $0x28] sm:$0xff]
    %v516 = vld [vmem:[#allocation2 + $0x30] sm:$0xff]
    %518 = vrot.lane.b32.xlu0 %v509, 96
    %v519 = vpop.permute.xlu0 %518
    %521 = vxpose.xlu0.b32.start [1/16] %v519, 128
    %522 = vxpose.xlu0.b32.cont [2/16] 0.0, 128
    %523 = vxpose.xlu0.b32.cont [3/16] 0.0, 128
    %524 = vxpose.xlu0.b32.cont [4/16] 0.0, 128
    %525 = vxpose.xlu0.b32.cont [5/16] 0.0, 128
    %526 = vxpose.xlu0.b32.cont [6/16] 0.0, 128
    %527 = vxpose.xlu0.b32.cont [7/16] 0.0, 128
    %528 = vxpose.xlu0.b32.cont [8/16] 0.0, 128
    %529 = vxpose.xlu0.b32.cont [9/16] 0.0, 128
    %530 = vxpose.xlu0.b32.cont [10/16] 0.0, 128
    %531 = vxpose.xlu0.b32.cont [11/16] 0.0, 128
    %532 = vxpose.xlu0.b32.cont [12/16] 0.0, 128
    %533 = vxpose.xlu0.b32.cont [13/16] 0.0, 128
    %534 = vxpose.xlu0.b32.cont [14/16] 0.0, 128
    %535 = vxpose.xlu0.b32.cont [15/16] 0.0, 128
    %536 = vxpose.xlu0.b32.end [16/16] 0.0, 128
    %v537 = vpop.trf.xlu0
    %v538 = vpop.trf.xlu0
    %v539 = vpop.trf.xlu0
    %v540 = vpop.trf.xlu0
    %v541 = vpop.trf.xlu0
    %v542 = vpop.trf.xlu0
    %v543 = vpop.trf.xlu0
    %v544 = vpop.trf.xlu0
    %v545 = vpop.trf.xlu0
    %v546 = vpop.trf.xlu0
    %v547 = vpop.trf.xlu0
    %v548 = vpop.trf.xlu0
    %v549 = vpop.trf.xlu0
    %v550 = vpop.trf.xlu0
    %v551 = vpop.trf.xlu0
    %v552 = vpop.trf.xlu0
    %v554 = vsel %vm94, %v537, 0
    %v557 = vsel %vm94, %v538, 0
    %v560 = vsel %vm94, %v539, 0
    %v563 = vsel %vm94, %v540, 0
    %565 = vmatprep.subr.mxu0 0.0
    %566 = vmatpush1.msra.mxu0 0.0
    %567 = vmatprep.subr.mxu0 0.0
    %568 = vmatpush1.msra.mxu0 0.0
    %569 = vmatprep.subr.mxu0 0.0
    %570 = vmatpush1.msra.mxu0 0.0
    %571 = vmatprep.subr.mxu0 0.0
    %572 = vmatpush1.msra.mxu0 0.0
    %573 = vmatprep.subr.mxu0 0.0
    %574 = vmatpush1.msra.mxu0 0.0
    %575 = vmatprep.subr.mxu0 0.0
    %576 = vmatpush1.msra.mxu0 0.0
    %577 = vmatprep.subr.mxu0 0.0
    %578 = vmatpush1.msra.mxu0 0.0
    %579 = vmatprep.subr.mxu0 0.0
    %580 = vmatpush1.msra.mxu0 0.0
    %581 = vmatprep.subr.mxu0 0.0
    %582 = vmatpush1.msra.mxu0 0.0
    %583 = vmatprep.subr.mxu0 0.0
    %584 = vmatpush1.msra.mxu0 0.0
    %585 = vmatprep.subr.mxu0 0.0
    %586 = vmatpush1.msra.mxu0 0.0
    %587 = vmatprep.subr.mxu0 0.0
    %588 = vmatpush1.msra.mxu0 0.0
    %589 = vmatprep.subr.mxu0 0.0
    %590 = vmatpush1.msra.mxu0 0.0
    %591 = vmatprep.subr.mxu0 0.0
    %592 = vmatpush1.msra.mxu0 0.0
    %593 = vmatprep.subr.mxu0 0.0
    %594 = vmatpush1.msra.mxu0 0.0
    %595 = vmatprep.subr.mxu0 %v511
    %596 = vmatpush1.msra.mxu0 %v510
    %597 = vmatprep.subr.mxu0 0.0
    %598 = vmatpush2.msra.mxu0 0.0
    %599 = vmatprep.subr.mxu0 0.0
    %600 = vmatpush2.msra.mxu0 0.0
    %601 = vmatprep.subr.mxu0 0.0
    %602 = vmatpush2.msra.mxu0 0.0
    %603 = vmatprep.subr.mxu0 0.0
    %604 = vmatpush2.msra.mxu0 0.0
    %605 = vmatprep.subr.mxu0 0.0
    %606 = vmatpush2.msra.mxu0 0.0
    %607 = vmatprep.subr.mxu0 0.0
    %608 = vmatpush2.msra.mxu0 0.0
    %609 = vmatprep.subr.mxu0 0.0
    %610 = vmatpush2.msra.mxu0 0.0
    %611 = vmatprep.subr.mxu0 0.0
    %612 = vmatpush2.msra.mxu0 0.0
    %613 = vmatprep.subr.mxu0 0.0
    %614 = vmatpush2.msra.mxu0 0.0
    %615 = vmatprep.subr.mxu0 0.0
    %616 = vmatpush2.msra.mxu0 0.0
    %617 = vmatprep.subr.mxu0 0.0
    %618 = vmatpush2.msra.mxu0 0.0
    %619 = vmatprep.subr.mxu0 0.0
    %620 = vmatpush2.msra.mxu0 0.0
    %621 = vmatprep.subr.mxu0 0.0
    %622 = vmatpush2.msra.mxu0 0.0
    %623 = vmatprep.subr.mxu0 0.0
    %624 = vmatpush2.msra.mxu0 0.0
    %625 = vmatprep.subr.mxu0 0.0
    %626 = vmatpush2.msra.mxu0 0.0
    %627 = vmatprep.subr.mxu0 0.0
    %628 = vmatpush2.msra.mxu0 0.0
    %629 = vmatprep.mubr.f32.mxu0 0.0
    %630 = vmatmul.mubr.f32.gmra.mxu0 %v554
    %v631 = vpop.f32.mrf.mxu0
    %v632 = vadd.f32 0.0, %v631
    %v633 = vpop.f32.mrf.mxu0
    %v634 = vadd.f32 0.0, %v633
    %635 = vmatprep.mubr.f32.mxu0 0.0
    %636 = vmatmul.mubr.f32.gmra.mxu0 %v557
    %v637 = vpop.f32.mrf.mxu0
    %v638 = vadd.f32 0.0, %v637
    %v639 = vpop.f32.mrf.mxu0
    %v640 = vadd.f32 0.0, %v639
    %641 = vmatprep.mubr.f32.mxu0 0.0
    %642 = vmatmul.mubr.f32.gmra.mxu0 %v560
    %v643 = vpop.f32.mrf.mxu0
    %v644 = vadd.f32 0.0, %v643
    %v645 = vpop.f32.mrf.mxu0
    %v646 = vadd.f32 0.0, %v645
    %647 = vmatprep.mubr.f32.mxu0 0.0
    %648 = vmatmul.mubr.f32.gmra.mxu0 %v563
    %v649 = vpop.f32.mrf.mxu0
    %v650 = vadd.f32 0.0, %v649
    %v651 = vpop.f32.mrf.mxu0
    %v652 = vadd.f32 0.0, %v651
    %653 = vdwg.mxu0
    %654 = vmatprep.subr.mxu0 0.0
    %655 = vmatpush1.msra.mxu0 0.0
    %656 = vmatprep.subr.mxu0 0.0
    %657 = vmatpush1.msra.mxu0 0.0
    %658 = vmatprep.subr.mxu0 0.0
    %659 = vmatpush1.msra.mxu0 0.0
    %660 = vmatprep.subr.mxu0 0.0
    %661 = vmatpush1.msra.mxu0 0.0
    %662 = vmatprep.subr.mxu0 0.0
    %663 = vmatpush1.msra.mxu0 0.0
    %664 = vmatprep.subr.mxu0 0.0
    %665 = vmatpush1.msra.mxu0 0.0
    %666 = vmatprep.subr.mxu0 0.0
    %667 = vmatpush1.msra.mxu0 0.0
    %668 = vmatprep.subr.mxu0 0.0
    %669 = vmatpush1.msra.mxu0 0.0
    %670 = vmatprep.subr.mxu0 0.0
    %671 = vmatpush1.msra.mxu0 0.0
    %672 = vmatprep.subr.mxu0 0.0
    %673 = vmatpush1.msra.mxu0 0.0
    %674 = vmatprep.subr.mxu0 0.0
    %675 = vmatpush1.msra.mxu0 0.0
    %676 = vmatprep.subr.mxu0 0.0
    %677 = vmatpush1.msra.mxu0 0.0
    %678 = vmatprep.subr.mxu0 0.0
    %679 = vmatpush1.msra.mxu0 0.0
    %680 = vmatprep.subr.mxu0 0.0
    %681 = vmatpush1.msra.mxu0 0.0
    %682 = vmatprep.subr.mxu0 0.0
    %683 = vmatpush1.msra.mxu0 0.0
    %684 = vmatprep.subr.mxu0 %v513
    %685 = vmatpush1.msra.mxu0 %v512
    %686 = vmatprep.subr.mxu0 0.0
    %687 = vmatpush2.msra.mxu0 0.0
    %688 = vmatprep.subr.mxu0 0.0
    %689 = vmatpush2.msra.mxu0 0.0
    %690 = vmatprep.subr.mxu0 0.0
    %691 = vmatpush2.msra.mxu0 0.0
    %692 = vmatprep.subr.mxu0 0.0
    %693 = vmatpush2.msra.mxu0 0.0
    %694 = vmatprep.subr.mxu0 0.0
    %695 = vmatpush2.msra.mxu0 0.0
    %696 = vmatprep.subr.mxu0 0.0
    %697 = vmatpush2.msra.mxu0 0.0
    %698 = vmatprep.subr.mxu0 0.0
    %699 = vmatpush2.msra.mxu0 0.0
    %700 = vmatprep.subr.mxu0 0.0
    %701 = vmatpush2.msra.mxu0 0.0
    %702 = vmatprep.subr.mxu0 0.0
    %703 = vmatpush2.msra.mxu0 0.0
    %704 = vmatprep.subr.mxu0 0.0
    %705 = vmatpush2.msra.mxu0 0.0
    %706 = vmatprep.subr.mxu0 0.0
    %707 = vmatpush2.msra.mxu0 0.0
    %708 = vmatprep.subr.mxu0 0.0
    %709 = vmatpush2.msra.mxu0 0.0
    %710 = vmatprep.subr.mxu0 0.0
    %711 = vmatpush2.msra.mxu0 0.0
    %712 = vmatprep.subr.mxu0 0.0
    %713 = vmatpush2.msra.mxu0 0.0
    %714 = vmatprep.subr.mxu0 0.0
    %715 = vmatpush2.msra.mxu0 0.0
    %716 = vmatprep.subr.mxu0 0.0
    %717 = vmatpush2.msra.mxu0 0.0
    %718 = vmatprep.mubr.f32.mxu0 0.0
    %719 = vmatmul.mubr.f32.gmra.mxu0 %v554
    %v720 = vpop.f32.mrf.mxu0
    %v721 = vadd.f32 0.0, %v720
    %v722 = vpop.f32.mrf.mxu0
    %v723 = vadd.f32 0.0, %v722
    %724 = vmatprep.mubr.f32.mxu0 0.0
    %725 = vmatmul.mubr.f32.gmra.mxu0 %v557
    %v726 = vpop.f32.mrf.mxu0
    %v727 = vadd.f32 0.0, %v726
    %v728 = vpop.f32.mrf.mxu0
    %v729 = vadd.f32 0.0, %v728
    %730 = vmatprep.mubr.f32.mxu0 0.0
    %731 = vmatmul.mubr.f32.gmra.mxu0 %v560
    %v732 = vpop.f32.mrf.mxu0
    %v733 = vadd.f32 0.0, %v732
    %v734 = vpop.f32.mrf.mxu0
    %v735 = vadd.f32 0.0, %v734
    %736 = vmatprep.mubr.f32.mxu0 0.0
    %737 = vmatmul.mubr.f32.gmra.mxu0 %v563
    %v738 = vpop.f32.mrf.mxu0
    %v739 = vadd.f32 0.0, %v738
    %v740 = vpop.f32.mrf.mxu0
    %v741 = vadd.f32 0.0, %v740
    %742 = vdwg.mxu0
    %743 = vmatprep.subr.mxu0 0.0
    %744 = vmatpush1.msra.mxu0 0.0
    %745 = vmatprep.subr.mxu0 0.0
    %746 = vmatpush1.msra.mxu0 0.0
    %747 = vmatprep.subr.mxu0 0.0
    %748 = vmatpush1.msra.mxu0 0.0
    %749 = vmatprep.subr.mxu0 0.0
    %750 = vmatpush1.msra.mxu0 0.0
    %751 = vmatprep.subr.mxu0 0.0
    %752 = vmatpush1.msra.mxu0 0.0
    %753 = vmatprep.subr.mxu0 0.0
    %754 = vmatpush1.msra.mxu0 0.0
    %755 = vmatprep.subr.mxu0 0.0
    %756 = vmatpush1.msra.mxu0 0.0
    %757 = vmatprep.subr.mxu0 0.0
    %758 = vmatpush1.msra.mxu0 0.0
    %759 = vmatprep.subr.mxu0 0.0
    %760 = vmatpush1.msra.mxu0 0.0
    %761 = vmatprep.subr.mxu0 0.0
    %762 = vmatpush1.msra.mxu0 0.0
    %763 = vmatprep.subr.mxu0 0.0
    %764 = vmatpush1.msra.mxu0 0.0
    %765 = vmatprep.subr.mxu0 0.0
    %766 = vmatpush1.msra.mxu0 0.0
    %767 = vmatprep.subr.mxu0 0.0
    %768 = vmatpush1.msra.mxu0 0.0
    %769 = vmatprep.subr.mxu0 0.0
    %770 = vmatpush1.msra.mxu0 0.0
    %771 = vmatprep.subr.mxu0 0.0
    %772 = vmatpush1.msra.mxu0 0.0
    %773 = vmatprep.subr.mxu0 %v515
    %774 = vmatpush1.msra.mxu0 %v514
    %775 = vmatprep.subr.mxu0 0.0
    %776 = vmatpush2.msra.mxu0 0.0
    %777 = vmatprep.subr.mxu0 0.0
    %778 = vmatpush2.msra.mxu0 0.0
    %779 = vmatprep.subr.mxu0 0.0
    %780 = vmatpush2.msra.mxu0 0.0
    %781 = vmatprep.subr.mxu0 0.0
    %782 = vmatpush2.msra.mxu0 0.0
    %783 = vmatprep.subr.mxu0 0.0
    %784 = vmatpush2.msra.mxu0 0.0
    %785 = vmatprep.subr.mxu0 0.0
    %786 = vmatpush2.msra.mxu0 0.0
    %787 = vmatprep.subr.mxu0 0.0
    %788 = vmatpush2.msra.mxu0 0.0
    %789 = vmatprep.subr.mxu0 0.0
    %790 = vmatpush2.msra.mxu0 0.0
    %791 = vmatprep.subr.mxu0 0.0
    %792 = vmatpush2.msra.mxu0 0.0
    %793 = vmatprep.subr.mxu0 0.0
    %794 = vmatpush2.msra.mxu0 0.0
    %795 = vmatprep.subr.mxu0 0.0
    %796 = vmatpush2.msra.mxu0 0.0
    %797 = vmatprep.subr.mxu0 0.0
    %798 = vmatpush2.msra.mxu0 0.0
    %799 = vmatprep.subr.mxu0 0.0
    %800 = vmatpush2.msra.mxu0 0.0
    %801 = vmatprep.subr.mxu0 0.0
    %802 = vmatpush2.msra.mxu0 0.0
    %803 = vmatprep.subr.mxu0 0.0
    %804 = vmatpush2.msra.mxu0 0.0
    %805 = vmatprep.subr.mxu0 0.0
    %806 = vmatpush2.msra.mxu0 0.0
    %807 = vmatprep.mubr.f32.mxu0 0.0
    %808 = vmatmul.mubr.f32.gmra.mxu0 %v554
    %v809 = vpop.f32.mrf.mxu0
    %v810 = vadd.f32 0.0, %v809
    %v811 = vpop.f32.mrf.mxu0
    %v812 = vadd.f32 0.0, %v811
    %813 = vmatprep.mubr.f32.mxu0 0.0
    %814 = vmatmul.mubr.f32.gmra.mxu0 %v557
    %v815 = vpop.f32.mrf.mxu0
    %v816 = vadd.f32 0.0, %v815
    %v817 = vpop.f32.mrf.mxu0
    %v818 = vadd.f32 0.0, %v817
    %819 = vmatprep.mubr.f32.mxu0 0.0
    %820 = vmatmul.mubr.f32.gmra.mxu0 %v560
    %v821 = vpop.f32.mrf.mxu0
    %v822 = vadd.f32 0.0, %v821
    %v823 = vpop.f32.mrf.mxu0
    %v824 = vadd.f32 0.0, %v823
    %825 = vmatprep.mubr.f32.mxu0 0.0
    %826 = vmatmul.mubr.f32.gmra.mxu0 %v563
    %v827 = vpop.f32.mrf.mxu0
    %v828 = vadd.f32 0.0, %v827
    %v829 = vpop.f32.mrf.mxu0
    %v830 = vadd.f32 0.0, %v829
    %831 = vdwg.mxu0
    %832 = vmatprep.subr.mxu0 0.0
    %833 = vmatpush1.msra.mxu0 0.0
    %834 = vmatprep.subr.mxu0 0.0
    %835 = vmatpush1.msra.mxu0 0.0
    %836 = vmatprep.subr.mxu0 0.0
    %837 = vmatpush1.msra.mxu0 0.0
    %838 = vmatprep.subr.mxu0 0.0
    %839 = vmatpush1.msra.mxu0 0.0
    %840 = vmatprep.subr.mxu0 0.0
    %841 = vmatpush1.msra.mxu0 0.0
    %842 = vmatprep.subr.mxu0 0.0
    %843 = vmatpush1.msra.mxu0 0.0
    %844 = vmatprep.subr.mxu0 0.0
    %845 = vmatpush1.msra.mxu0 0.0
    %846 = vmatprep.subr.mxu0 0.0
    %847 = vmatpush1.msra.mxu0 0.0
    %848 = vmatprep.subr.mxu0 0.0
    %849 = vmatpush1.msra.mxu0 0.0
    %850 = vmatprep.subr.mxu0 0.0
    %851 = vmatpush1.msra.mxu0 0.0
    %852 = vmatprep.subr.mxu0 0.0
    %853 = vmatpush1.msra.mxu0 0.0
    %854 = vmatprep.subr.mxu0 0.0
    %855 = vmatpush1.msra.mxu0 0.0
    %856 = vmatprep.subr.mxu0 0.0
    %857 = vmatpush1.msra.mxu0 0.0
    %858 = vmatprep.subr.mxu0 0.0
    %859 = vmatpush1.msra.mxu0 0.0
    %860 = vmatprep.subr.mxu0 0.0
    %861 = vmatpush1.msra.mxu0 0.0
    %862 = vmatprep.subr.mxu0 0.0
    %863 = vmatpush1.msra.mxu0 %v516
    %864 = vmatprep.subr.mxu0 0.0
    %865 = vmatpush2.msra.mxu0 0.0
    %866 = vmatprep.subr.mxu0 0.0
    %867 = vmatpush2.msra.mxu0 0.0
    %868 = vmatprep.subr.mxu0 0.0
    %869 = vmatpush2.msra.mxu0 0.0
    %870 = vmatprep.subr.mxu0 0.0
    %871 = vmatpush2.msra.mxu0 0.0
    %872 = vmatprep.subr.mxu0 0.0
    %873 = vmatpush2.msra.mxu0 0.0
    %874 = vmatprep.subr.mxu0 0.0
    %875 = vmatpush2.msra.mxu0 0.0
    %876 = vmatprep.subr.mxu0 0.0
    %877 = vmatpush2.msra.mxu0 0.0
    %878 = vmatprep.subr.mxu0 0.0
    %879 = vmatpush2.msra.mxu0 0.0
    %880 = vmatprep.subr.mxu0 0.0
    %881 = vmatpush2.msra.mxu0 0.0
    %882 = vmatprep.subr.mxu0 0.0
    %883 = vmatpush2.msra.mxu0 0.0
    %884 = vmatprep.subr.mxu0 0.0
    %885 = vmatpush2.msra.mxu0 0.0
    %886 = vmatprep.subr.mxu0 0.0
    %887 = vmatpush2.msra.mxu0 0.0
    %888 = vmatprep.subr.mxu0 0.0
    %889 = vmatpush2.msra.mxu0 0.0
    %890 = vmatprep.subr.mxu0 0.0
    %891 = vmatpush2.msra.mxu0 0.0
    %892 = vmatprep.subr.mxu0 0.0
    %893 = vmatpush2.msra.mxu0 0.0
    %894 = vmatprep.subr.mxu0 0.0
    %895 = vmatpush2.msra.mxu0 0.0
    %896 = vmatprep.mubr.f32.mxu0 0.0
    %897 = vmatmul.mubr.f32.gmra.mxu0 %v554
    %v898 = vpop.f32.mrf.mxu0
    %v899 = vadd.f32 0.0, %v898
    %v900 = vpop.f32.mrf.mxu0
    %901 = vmatprep.mubr.f32.mxu0 0.0
    %902 = vmatmul.mubr.f32.gmra.mxu0 %v557
    %v903 = vpop.f32.mrf.mxu0
    %v904 = vadd.f32 0.0, %v903
    %v905 = vpop.f32.mrf.mxu0
    %906 = vmatprep.mubr.f32.mxu0 0.0
    %907 = vmatmul.mubr.f32.gmra.mxu0 %v560
    %v908 = vpop.f32.mrf.mxu0
    %v909 = vadd.f32 0.0, %v908
    %v910 = vpop.f32.mrf.mxu0
    %911 = vmatprep.mubr.f32.mxu0 0.0
    %912 = vmatmul.mubr.f32.gmra.mxu0 %v563
    %v913 = vpop.f32.mrf.mxu0
    %v914 = vadd.f32 0.0, %v913
    %v915 = vpop.f32.mrf.mxu0
    %916 = vdwg.mxu0
    %917 = vst [vmem:[#allocation8] sm:$0xff] %v632
    %918 = vst [vmem:[#allocation8 + $0x8] sm:$0xff] %v634
    %919 = vst [vmem:[#allocation8 + $0x10] sm:$0xff] %v721
    %920 = vst [vmem:[#allocation8 + $0x18] sm:$0xff] %v723
    %921 = vst [vmem:[#allocation8 + $0x20] sm:$0xff] %v810
    %922 = vst [vmem:[#allocation8 + $0x28] sm:$0xff] %v812
    %923 = vst [vmem:[#allocation8 + $0x30] sm:$0xff] %v899
    %924 = vst [vmem:[#allocation8 + $0x40] sm:$0xff] %v638
    %925 = vst [vmem:[#allocation8 + $0x48] sm:$0xff] %v640
    %926 = vst [vmem:[#allocation8 + $0x50] sm:$0xff] %v727
    %927 = vst [vmem:[#allocation8 + $0x58] sm:$0xff] %v729
    %928 = vst [vmem:[#allocation8 + $0x60] sm:$0xff] %v816
    %929 = vst [vmem:[#allocation8 + $0x68] sm:$0xff] %v818
    %930 = vst [vmem:[#allocation8 + $0x70] sm:$0xff] %v904
    %931 = vst [vmem:[#allocation8 + $0x80] sm:$0xff] %v644
    %932 = vst [vmem:[#allocation8 + $0x88] sm:$0xff] %v646
    %933 = vst [vmem:[#allocation8 + $0x90] sm:$0xff] %v733
    %934 = vst [vmem:[#allocation8 + $0x98] sm:$0xff] %v735
    %935 = vst [vmem:[#allocation8 + $0xa0] sm:$0xff] %v822
    %936 = vst [vmem:[#allocation8 + $0xa8] sm:$0xff] %v824
    %937 = vst [vmem:[#allocation8 + $0xb0] sm:$0xff] %v909
    %938 = vst [vmem:[#allocation8 + $0xc0] sm:$0xff] %v650
    %939 = vst [vmem:[#allocation8 + $0xc8] sm:$0xff] %v652
    %940 = vst [vmem:[#allocation8 + $0xd0] sm:$0xff] %v739
    %941 = vst [vmem:[#allocation8 + $0xd8] sm:$0xff] %v741
    %942 = vst [vmem:[#allocation8 + $0xe0] sm:$0xff] %v828
    %943 = vst [vmem:[#allocation8 + $0xe8] sm:$0xff] %v830
    %944 = vst [vmem:[#allocation8 + $0xf0] sm:$0xff] %v914
    %945 = vst.msk [vmem:[#allocation8 + $0x38] sm:$0xff] %vm208, %v403
    %946 = vst.msk [vmem:[#allocation8 + $0x78] sm:$0xff] %vm208, %v408
    %947 = vst.msk [vmem:[#allocation8 + $0xb8] sm:$0xff] %vm208, %v413
    %948 = vst.msk [vmem:[#allocation8 + $0xf8] sm:$0xff] %vm208, %v418
    %953 = vrot.lane.b32.xlu0 %v174, 32
    %v954 = vpop.permute.xlu0 %953
    %955 = vrot.lane.b32.xlu0 %v179, 32
    %v956 = vpop.permute.xlu0 %955
    %957 = vrot.lane.b32.xlu0 %v184, 32
    %v958 = vpop.permute.xlu0 %957
    %959 = vrot.lane.b32.xlu0 %v189, 32
    %v960 = vpop.permute.xlu0 %959
    %vm965 = vcmask 523520
    %966 = vst.msk [vmem:[#allocation8 + $0x38] sm:$0xff] %vm965, %v954
    %967 = vst.msk [vmem:[#allocation8 + $0x78] sm:$0xff] %vm965, %v956
    %968 = vst.msk [vmem:[#allocation8 + $0xb8] sm:$0xff] %vm965, %v958
    %969 = vst.msk [vmem:[#allocation8 + $0xf8] sm:$0xff] %vm965, %v960
    %vm970 = vcmask 1048064
    %971 = vst.msk [vmem:[#allocation8 + $0x38] sm:$0xff] %vm970, 0.0
    %972 = vst.msk [vmem:[#allocation8 + $0x78] sm:$0xff] %vm970, 0.0
    %973 = vst.msk [vmem:[#allocation8 + $0xb8] sm:$0xff] %vm970, 0.0
    %974 = vst.msk [vmem:[#allocation8 + $0xf8] sm:$0xff] %vm970, 0.0
    // Predicated region
    $region26: #{tpu_custom_call.1} parent=1 // pred_check
      _
    $region27: #{tpu_custom_call.1} parent=1 // pred_check_branch
      %976 = sbr.rel (0) target = $region29
    $region28: #{tpu_custom_call.1} parent=1 // pred_region
      %s978 = ssub.s32 4096, 4096
      %979 = vsyncadd [#allocation4], %s978
      %s980 = sshll.u32 [#allocation8], 4
      %s981 = int_to_ptr.vmem [resolvable:$true] %s980
      %986 = dma.vmem_to_hbm [thread:$0]  %s981, 4096, %s3, [#allocation4], 1024, 1024, 64
    $region29: #{tpu_custom_call.1} parent=1 // pred_fallthru
      _
    // Predicated region
    $region30: #{tpu_custom_call.1} parent=1 // pred_check
      _
    $region31: #{tpu_custom_call.1} parent=1 // pred_check_branch
      %988 = sbr.rel (0) target = $region33
    $region32: #{tpu_custom_call.1} parent=1 // pred_region
      %989 = dma.done [#allocation4], 4096
    $region33: #{tpu_custom_call.1} parent=1 // pred_fallthru
      _
    %990 = vsyncpa [#allocation3], 1
    %991 = vsyncpa [#allocation6], 1
    %992 = vsyncpa [#allocation4], 1

</llo_original>
